<compile_context>
chip_gen: v5e
topology: v5e:2x2
jax: 0.10.0
libtpu: 0.0.40
codegen_flags: <defaults>
</compile_context>

<pallas_src>
import functools

import jax
import jax.numpy as jnp
from jax.experimental import pallas as pl
from jax.experimental.pallas import tpu as pltpu


def actor_kernel(x_ref, w1_ref, w2_ref, w3_ref, bias_ref, o_ref):
    mxu_dtype = w1_ref.dtype            # bf16 or f32 (pre-cast in prepare step)
    h1_dim = w1_ref.shape[1]            # 256
    h2_dim = w2_ref.shape[1]            # 128 (padded)
    a_dim = o_ref.shape[1]              # true action_dim (e.g. 8)

    # Cast the streamed f32 activations to the MXU dtype inside the kernel
    # (VPU work, hidden under the input DMA).
    x = x_ref[...].astype(mxu_dtype)

    # Layer 1: Linear(S -> 256) + ReLU (MXU, f32 accumulation)
    h1 = jnp.dot(x, w1_ref[...], preferred_element_type=jnp.float32)
    h1 = jnp.maximum(h1 + bias_ref[0:1, :h1_dim], 0.0)

    # Layer 2: Linear(256 -> 128 padded) + ReLU
    h2 = jnp.dot(h1.astype(mxu_dtype), w2_ref[...],
                 preferred_element_type=jnp.float32)
    h2 = jnp.maximum(h2 + bias_ref[1:2, :h2_dim], 0.0)

    # Layer 3: Linear(128 padded -> 128 padded) + tanh, then keep only the
    # first a_dim lanes (padded weight columns are zero).
    h3 = jnp.dot(h2.astype(mxu_dtype), w3_ref[...],
                 preferred_element_type=jnp.float32)
    o_ref[...] = jnp.tanh(h3[:, :a_dim] + bias_ref[2:3, :a_dim])


def prepare_actor_params(params, *, use_bf16=False):
    """One-time packing: pad hidden dims to lane multiples, pack biases, cast
    weights to the MXU dtype. Keep this OUT of the per-forward hot path."""
    w1, b1 = params["w1"], params["b1"]
    w2, b2 = params["w2"], params["b2"]
    w3, b3 = params["w3"], params["b3"]
    S, H1 = w1.shape
    H2 = w2.shape[1]
    A = w3.shape[1]
    H2p = ((H2 + 127) // 128) * 128          # 64 -> 128
    Ap = ((A + 127) // 128) * 128            # pad MXU N-dim of layer 3

    wdtype = jnp.bfloat16 if use_bf16 else jnp.float32
    w2p = jnp.zeros((H1, H2p), jnp.float32).at[:, :H2].set(w2)
    w3p = jnp.zeros((H2p, Ap), jnp.float32).at[:H2, :A].set(w3)

    bias_w = max(H1, H2p, Ap)
    bias = jnp.zeros((3, bias_w), jnp.float32)
    bias = bias.at[0, :H1].set(b1.reshape(-1))
    bias = bias.at[1, :H2].set(b2.reshape(-1))
    bias = bias.at[2, :A].set(b3.reshape(-1))

    return {
        "w1": w1.astype(wdtype),
        "w2": w2p.astype(wdtype),
        "w3": w3p.astype(wdtype),
        "bias": bias,
    }


def _actor_forward(state, w1, w2p, w3p, bias, *, action_dim, block_batch):
    B, S = state.shape
    H1 = w1.shape[1]
    H2p = w2p.shape[1]
    Ap = w3p.shape[1]
    A = action_dim
    use_bf16 = w1.dtype == jnp.bfloat16

    # ---- Batch tiling -------------------------------------------------------
    align = 16 if use_bf16 else 8            # bf16 packs 16 rows / sublane group
    target = min(block_batch, B)
    if B > align:                            # aim for >=2 grid steps (megacore)
        target = min(target, -(-B // 2))
    TB = max(align, -(-max(target, 1) // align) * align)
    B_pad = -(-B // TB) * TB

    x = state
    if B_pad != B:
        x = jnp.pad(x, ((0, B_pad - B), (0, 0)))

    grid = (B_pad // TB,)

    itemsize = lambda a: a.size * jnp.dtype(a.dtype).itemsize
    cost = pl.CostEstimate(
        flops=2 * B_pad * (S * H1 + H1 * H2p + H2p * Ap),
        transcendentals=B_pad * A,
        bytes_accessed=int(B_pad * S * 4 + itemsize(w1) + itemsize(w2p)
                           + itemsize(w3p) + itemsize(bias) + B_pad * A * 4),
    )

    out = pl.pallas_call(
        actor_kernel,
        out_shape=jax.ShapeDtypeStruct((B_pad, A), jnp.float32),
        grid=grid,
        in_specs=[
            # activation stream: tiled over batch, double-buffered by Pallas
            pl.BlockSpec((TB, S), lambda i: (i, 0)),
            # weights / biases: constant block index -> fetched once, VMEM-resident
            pl.BlockSpec(w1.shape, lambda i: (0, 0)),
            pl.BlockSpec(w2p.shape, lambda i: (0, 0)),
            pl.BlockSpec(w3p.shape, lambda i: (0, 0)),
            pl.BlockSpec(bias.shape, lambda i: (0, 0)),
        ],
        # narrow (TB, A) output block: A equals the full array last dim, so it is
        # legal; HBM writeback is only A*4 bytes/row instead of 512 bytes/row.
        out_specs=pl.BlockSpec((TB, A), lambda i: (i, 0)),
        compiler_params=pltpu.CompilerParams(
            dimension_semantics=("parallel",),      # megacore sharding on v7x
            vmem_limit_bytes=32 * 1024 * 1024,      # above v5e's 16 MiB default,
        ),                                          # well under v7x's 64 MiB
        cost_estimate=cost,
    )(x, w1, w2p, w3p, bias)

    return out[:B] if B_pad != B else out


def make_actor_fn(params, *, use_bf16=False, block_batch=4096):
    """Returns a jitted forward fn with weights pre-packed outside the hot path."""
    prepared = prepare_actor_params(params, use_bf16=use_bf16)
    action_dim = params["w3"].shape[1]
    fwd = functools.partial(
        _actor_forward,
        w1=prepared["w1"], w2p=prepared["w2"], w3p=prepared["w3"],
        bias=prepared["bias"], action_dim=action_dim, block_batch=block_batch)
    return jax.jit(fwd)


def init_actor_params(key, state_dim, action_dim):
    """Deterministic init mimicking nn.Linear's U(-1/sqrt(fan_in), 1/sqrt(fan_in)).
    Weights stored (in_features, out_features) so the kernel computes y = x@W + b."""
    dims = [(state_dim, 256), (256, 64), (64, action_dim)]
    params = {}
    for i, (fan_in, fan_out) in enumerate(dims, start=1):
        key, kw, kb = jax.random.split(key, 3)
        bound = 1.0 / jnp.sqrt(float(fan_in))
        params[f"w{i}"] = jax.random.uniform(
            kw, (fan_in, fan_out), jnp.float32, -bound, bound)
        params[f"b{i}"] = jax.random.uniform(
            kb, (1, fan_out), jnp.float32, -bound, bound)
    return params


def actor_ref(state, params):
    """Pure-JAX reference for correctness checking."""
    h = jax.nn.relu(state @ params["w1"] + params["b1"])
    h = jax.nn.relu(h @ params["w2"] + params["b2"])
    return jnp.tanh(h @ params["w3"] + params["b3"])


if __name__ == "__main__":
    state_dim, action_dim, batch = 32, 8, 8

    key = jax.random.PRNGKey(0)
    key, kx, kx2 = jax.random.split(key, 3)
    params = init_actor_params(key, state_dim, action_dim)
    state = jax.random.normal(kx, (batch, state_dim), jnp.float32)

    # f32 path (exact semantics of the PyTorch module).
    actor = make_actor_fn(params)
    out = jax.block_until_ready(actor(state))
    ref = actor_ref(state, params)
    assert out.shape == (batch, action_dim)
    assert jnp.allclose(out, ref, atol=1e-5, rtol=1e-5)

    # Multi-tile path: batch not divisible by the tile, exercises grid + padding.
    big_state = jax.random.normal(kx2, (300, state_dim), jnp.float32)
    actor_small_tile = make_actor_fn(params, block_batch=128)
    out_big = jax.block_until_ready(actor_small_tile(big_state))
    ref_big = actor_ref(big_state, params)
    assert out_big.shape == (300, action_dim)
    assert jnp.allclose(out_big, ref_big, atol=1e-5, rtol=1e-5)

    # bf16-weight MXU fast path (all generations): relaxed tolerance.
    actor_bf16 = make_actor_fn(params, use_bf16=True)
    out_bf16 = jax.block_until_ready(actor_bf16(state))
    assert jnp.allclose(out_bf16, ref, atol=5e-2, rtol=5e-2)

    print("KERNEL_OK")
</pallas_src>

<mosaic_0001>
module attributes {stable_mosaic.version = 11 : i64} {
  func.func @actor_kernel(%arg0: i32, %arg1: memref<8x32xf32, #tpu.memory_space<vmem>>, %arg2: memref<32x256xf32, #tpu.memory_space<vmem>>, %arg3: memref<256x128xf32, #tpu.memory_space<vmem>>, %arg4: memref<128x128xf32, #tpu.memory_space<vmem>>, %arg5: memref<3x256xf32, #tpu.memory_space<vmem>>, %arg6: memref<8x8xf32, #tpu.memory_space<vmem>>) attributes {dimension_semantics = [#tpu.dimension_semantics<parallel>], iteration_bounds = array<i64: 1>, scalar_prefetch = 0 : i64, scratch_operands = 0 : i64, tpu.core_type = #tpu.core_type<tc>, window_params = [{transform_indices = @transform_0, window_bounds = array<i64: 8, 32>}, {pipeline_mode = #tpu.pipeline_mode<synchronous>, transform_indices = @transform_1, window_bounds = array<i64: 32, 256>}, {pipeline_mode = #tpu.pipeline_mode<synchronous>, transform_indices = @transform_2, window_bounds = array<i64: 256, 128>}, {pipeline_mode = #tpu.pipeline_mode<synchronous>, transform_indices = @transform_3, window_bounds = array<i64: 128, 128>}, {pipeline_mode = #tpu.pipeline_mode<synchronous>, transform_indices = @transform_4, window_bounds = array<i64: 3, 256>}, {transform_indices = @transform_5, window_bounds = array<i64: 8, 8>}]} {
    %c0 = arith.constant 0 : index
    %c0_0 = arith.constant 0 : index
    %0 = vector.load %arg1[%c0, %c0_0] : memref<8x32xf32, #tpu.memory_space<vmem>>, vector<8x32xf32>
    %c0_1 = arith.constant 0 : index
    %c0_2 = arith.constant 0 : index
    %1 = vector.load %arg2[%c0_1, %c0_2] : memref<32x256xf32, #tpu.memory_space<vmem>>, vector<32x256xf32>
    %cst = arith.constant dense<0.000000e+00> : vector<8x256xf32>
    %2 = tpu.matmul %0, %1, %cst {dimension_numbers = #tpu.dot_dimension_numbers<[1], [0], [0], [1], [0, 0, 1, 1], [], []>} : vector<8x32xf32>, vector<32x256xf32>, vector<8x256xf32> -> vector<8x256xf32>
    %c0_3 = arith.constant 0 : index
    %c0_4 = arith.constant 0 : index
    %3 = vector.load %arg5[%c0_3, %c0_4] : memref<3x256xf32, #tpu.memory_space<vmem>>, vector<1x256xf32>
    %4 = vector.broadcast %3 : vector<1x256xf32> to vector<8x256xf32>
    %5 = arith.addf %2, %4 : vector<8x256xf32>
    %cst_5 = arith.constant 0.000000e+00 : f32
    %6 = vector.broadcast %cst_5 : f32 to vector<8x256xf32>
    %7 = arith.maximumf %5, %6 : vector<8x256xf32>
    %c0_6 = arith.constant 0 : index
    %c0_7 = arith.constant 0 : index
    %8 = vector.load %arg3[%c0_6, %c0_7] : memref<256x128xf32, #tpu.memory_space<vmem>>, vector<256x128xf32>
    %cst_8 = arith.constant dense<0.000000e+00> : vector<8x128xf32>
    %9 = tpu.matmul %7, %8, %cst_8 {dimension_numbers = #tpu.dot_dimension_numbers<[1], [0], [0], [1], [0, 0, 1, 1], [], []>} : vector<8x256xf32>, vector<256x128xf32>, vector<8x128xf32> -> vector<8x128xf32>
    %c1 = arith.constant 1 : index
    %c0_9 = arith.constant 0 : index
    %10 = vector.load %arg5[%c1, %c0_9] : memref<3x256xf32, #tpu.memory_space<vmem>>, vector<1x128xf32>
    %11 = vector.broadcast %10 : vector<1x128xf32> to vector<8x128xf32>
    %12 = arith.addf %9, %11 : vector<8x128xf32>
    %cst_10 = arith.constant 0.000000e+00 : f32
    %13 = vector.broadcast %cst_10 : f32 to vector<8x128xf32>
    %14 = arith.maximumf %12, %13 : vector<8x128xf32>
    %c0_11 = arith.constant 0 : index
    %c0_12 = arith.constant 0 : index
    %15 = vector.load %arg4[%c0_11, %c0_12] : memref<128x128xf32, #tpu.memory_space<vmem>>, vector<128x128xf32>
    %cst_13 = arith.constant dense<0.000000e+00> : vector<8x128xf32>
    %16 = tpu.matmul %14, %15, %cst_13 {dimension_numbers = #tpu.dot_dimension_numbers<[1], [0], [0], [1], [0, 0, 1, 1], [], []>} : vector<8x128xf32>, vector<128x128xf32>, vector<8x128xf32> -> vector<8x128xf32>
    %17 = vector.extract_strided_slice %16 {offsets = [0, 0], sizes = [8, 8], strides = [1, 1]} : vector<8x128xf32> to vector<8x8xf32>
    %c2 = arith.constant 2 : index
    %c0_14 = arith.constant 0 : index
    %18 = vector.load %arg5[%c2, %c0_14] : memref<3x256xf32, #tpu.memory_space<vmem>>, vector<1x8xf32>
    %19 = vector.broadcast %18 : vector<1x8xf32> to vector<8x8xf32>
    %20 = arith.addf %17, %19 : vector<8x8xf32>
    %21 = math.tanh %20 : vector<8x8xf32>
    %c0_15 = arith.constant 0 : index
    %c0_16 = arith.constant 0 : index
    %22 = vector.load %arg6[%c0_15, %c0_16] : memref<8x8xf32, #tpu.memory_space<vmem>>, vector<8x8xf32>
    tpu.vector_store %arg6[%c0_15, %c0_16], %21 {strides = array<i32>} : memref<8x8xf32, #tpu.memory_space<vmem>>, vector<8x8xf32>,
    return
  }
  func.func @transform_0(%arg0: i32) -> (i32, i32) {
    %c0_i32 = arith.constant 0 : i32
    %c0_i32_0 = arith.constant 0 : i32
    return %arg0, %c0_i32 : i32, i32
  }
  func.func @transform_1(%arg0: i32) -> (i32, i32) {
    %c0_i32 = arith.constant 0 : i32
    %c0_i32_0 = arith.constant 0 : i32
    %c0_i32_1 = arith.constant 0 : i32
    return %c0_i32, %c0_i32_0 : i32, i32
  }
  func.func @transform_2(%arg0: i32) -> (i32, i32) {
    %c0_i32 = arith.constant 0 : i32
    %c0_i32_0 = arith.constant 0 : i32
    %c0_i32_1 = arith.constant 0 : i32
    return %c0_i32, %c0_i32_0 : i32, i32
  }
  func.func @transform_3(%arg0: i32) -> (i32, i32) {
    %c0_i32 = arith.constant 0 : i32
    %c0_i32_0 = arith.constant 0 : i32
    %c0_i32_1 = arith.constant 0 : i32
    return %c0_i32, %c0_i32_0 : i32, i32
  }
  func.func @transform_4(%arg0: i32) -> (i32, i32) {
    %c0_i32 = arith.constant 0 : i32
    %c0_i32_0 = arith.constant 0 : i32
    %c0_i32_1 = arith.constant 0 : i32
    return %c0_i32, %c0_i32_0 : i32, i32
  }
  func.func @transform_5(%arg0: i32) -> (i32, i32) {
    %c0_i32 = arith.constant 0 : i32
    %c0_i32_0 = arith.constant 0 : i32
    return %arg0, %c0_i32 : i32, i32
  }
}

</mosaic_0001>

<llo_original>
// kernel: _actor_forward.1
$region0: #{_actor_forward.1}
  #allocation0 [shape = 'u32[]', space=smem, size = 0x4, offset = 0x4, fixed_abs, tag = 'smem constant byte address 0x4 - core index']
  #allocation1 [shape = 'u32[72,128]{1,0:T(1,128)}', space=vmem, size = 0x9000, scoped, tag = 'internal scratch']
  %s0 = inlined_call_operand.hbm [shape: f32[8,32], index: 0, kind: input, shape index: {}]
  %s1 = inlined_call_operand.hbm [shape: f32[32,256], index: 1, kind: input, shape index: {}]
  %s2 = inlined_call_operand.hbm [shape: f32[256,128], index: 2, kind: input, shape index: {}]
  %s3 = inlined_call_operand.hbm [shape: f32[128,128], index: 3, kind: input, shape index: {}]
  %s4 = inlined_call_operand.hbm [shape: f32[3,256], index: 4, kind: input, shape index: {}]
  %s5 = inlined_call_operand.hbm [shape: f32[8,8], index: 5, kind: output, shape index: {}]
  %s6 = sld [smem:[#allocation0]]
  $region50: #{_actor_forward.1} parent=0
    _
  %s8 = ssub.s32 1, %s6
  %s9 = scalar_select 0, %s8, %s6
  $region1: #{_actor_forward.1} parent=0
    #allocation2 [shape = 'u8[4096]{0}', space=vmem, size = 0x1000, scoped, tag = 'input window, operand 0, single buffered']
    #allocation3 [shape = 's32[1]{0}', space=sflag, size = 0x4, scoped, tag = 'scoped memory for _actor_forward.1']
    #allocation4 [shape = 's32[1]{0}', space=sflag, size = 0x4, scoped, tag = 'scoped memory for _actor_forward.1']
    #allocation5 [shape = 'u8[32768]{0}', space=vmem, size = 0x8000, scoped, tag = 'input window, operand 1, single buffered']
    #allocation6 [shape = 's32[1]{0}', space=sflag, size = 0x4, scoped, tag = 'scoped memory for _actor_forward.1']
    #allocation7 [shape = 'u8[131072]{0}', space=vmem, size = 0x20000, scoped, tag = 'input window, operand 2, single buffered']
    #allocation8 [shape = 'u8[65536]{0}', space=vmem, size = 0x10000, scoped, tag = 'input window, operand 3, single buffered']
    #allocation9 [shape = 's32[1]{0}', space=sflag, size = 0x4, scoped, tag = 'scoped memory for _actor_forward.1']
    #allocation10 [shape = 'u8[4096]{0}', space=vmem, size = 0x1000, scoped, tag = 'input window, operand 4, single buffered']
    #allocation11 [shape = 'u8[4096]{0}', space=vmem, size = 0x1000, scoped, tag = 'output window, operand 0, single buffered']
    %10 = vsyncpa [#allocation3], 0
    %11 = vsyncpa [#allocation6], 0
    %12 = vsyncpa [#allocation9], 0
    %13 = vsyncpa [#allocation4], 0
    // Predicated region
    $region2: #{_actor_forward.1} parent=1 // pred_check
      _
    $region3: #{_actor_forward.1} parent=1 // pred_check_branch
      %15 = sbr.rel (0) target = $region5
    $region4: #{_actor_forward.1} parent=1 // pred_region
      %17 = vsyncadd [#allocation3], 0
      %s19 = sshll.u32 %s0, 4
      %s20 = int_to_ptr.hbm [resolvable:$true] %s19
      %s21 = sshll.u32 [#allocation2], 4
      %s22 = int_to_ptr.vmem [resolvable:$true] %s21
      %24 = dma.hbm_to_vmem [thread:$0]  %s20, 128, %s22, [#allocation3]
    $region5: #{_actor_forward.1} parent=1 // pred_fallthru
      _
    // Predicated region
    $region6: #{_actor_forward.1} parent=1 // pred_check
      _
    $region7: #{_actor_forward.1} parent=1 // pred_check_branch
      %26 = sbr.rel (0) target = $region9
    $region8: #{_actor_forward.1} parent=1 // pred_region
      %28 = vsyncadd [#allocation6], 0
      %s29 = sshll.u32 %s1, 4
      %s30 = int_to_ptr.hbm [resolvable:$true] %s29
      %s31 = sshll.u32 [#allocation5], 4
      %s32 = int_to_ptr.vmem [resolvable:$true] %s31
      %37 = dma.hbm_to_vmem [thread:$0]  %s30, 1024, %s32, [#allocation6], 256, 256, 16
    $region9: #{_actor_forward.1} parent=1 // pred_fallthru
      _
    // Predicated region
    $region10: #{_actor_forward.1} parent=1 // pred_check
      _
    $region11: #{_actor_forward.1} parent=1 // pred_check_branch
      %39 = sbr.rel (0) target = $region13
    $region12: #{_actor_forward.1} parent=1 // pred_region
      %41 = vsyncadd [#allocation6], 0
      %s42 = sshll.u32 %s2, 4
      %s43 = int_to_ptr.hbm [resolvable:$true] %s42
      %s44 = sshll.u32 [#allocation7], 4
      %s45 = int_to_ptr.vmem [resolvable:$true] %s44
      %50 = dma.hbm_to_vmem [thread:$0]  %s43, 4096, %s45, [#allocation6], 128, 128, 8
    $region13: #{_actor_forward.1} parent=1 // pred_fallthru
      _
    // Predicated region
    $region14: #{_actor_forward.1} parent=1 // pred_check
      _
    $region15: #{_actor_forward.1} parent=1 // pred_check_branch
      %52 = sbr.rel (0) target = $region17
    $region16: #{_actor_forward.1} parent=1 // pred_region
      %54 = vsyncadd [#allocation9], 0
      %s55 = sshll.u32 %s3, 4
      %s56 = int_to_ptr.hbm [resolvable:$true] %s55
      %s57 = sshll.u32 [#allocation8], 4
      %s58 = int_to_ptr.vmem [resolvable:$true] %s57
      %63 = dma.hbm_to_vmem [thread:$0]  %s56, 2048, %s58, [#allocation9], 128, 128, 8
    $region17: #{_actor_forward.1} parent=1 // pred_fallthru
      _
    // Predicated region
    $region18: #{_actor_forward.1} parent=1 // pred_check
      _
    $region19: #{_actor_forward.1} parent=1 // pred_check_branch
      %65 = sbr.rel (0) target = $region21
    $region20: #{_actor_forward.1} parent=1 // pred_region
      %67 = vsyncadd [#allocation9], 0
      %s69 = sshll.u32 %s4, 4
      %s70 = int_to_ptr.hbm [resolvable:$true] %s69
      %s71 = sshll.u32 [#allocation10], 4
      %s72 = int_to_ptr.vmem [resolvable:$true] %s71
      %74 = dma.hbm_to_vmem [thread:$0]  %s70, 128, %s72, [#allocation9]
    $region21: #{_actor_forward.1} parent=1 // pred_fallthru
      _
    // Predicated region
    $region22: #{_actor_forward.1} parent=1 // pred_check
      _
    $region23: #{_actor_forward.1} parent=1 // pred_check_branch
      %76 = sbr.rel (0) target = $region25
    $region24: #{_actor_forward.1} parent=1 // pred_region
      %78 = dma.done [#allocation3], 128
    $region25: #{_actor_forward.1} parent=1 // pred_fallthru
      _
    // Predicated region
    $region26: #{_actor_forward.1} parent=1 // pred_check
      _
    $region27: #{_actor_forward.1} parent=1 // pred_check_branch
      %80 = sbr.rel (0) target = $region29
    $region28: #{_actor_forward.1} parent=1 // pred_region
      %82 = dma.done [#allocation6], 1024
    $region29: #{_actor_forward.1} parent=1 // pred_fallthru
      _
    // Predicated region
    $region30: #{_actor_forward.1} parent=1 // pred_check
      _
    $region31: #{_actor_forward.1} parent=1 // pred_check_branch
      %84 = sbr.rel (0) target = $region33
    $region32: #{_actor_forward.1} parent=1 // pred_region
      %86 = dma.done [#allocation6], 4096
    $region33: #{_actor_forward.1} parent=1 // pred_fallthru
      _
    // Predicated region
    $region34: #{_actor_forward.1} parent=1 // pred_check
      _
    $region35: #{_actor_forward.1} parent=1 // pred_check_branch
      %88 = sbr.rel (0) target = $region37
    $region36: #{_actor_forward.1} parent=1 // pred_region
      %90 = dma.done [#allocation9], 2048
    $region37: #{_actor_forward.1} parent=1 // pred_fallthru
      _
    // Predicated region
    $region38: #{_actor_forward.1} parent=1 // pred_check
      _
    $region39: #{_actor_forward.1} parent=1 // pred_check_branch
      %92 = sbr.rel (0) target = $region41
    $region40: #{_actor_forward.1} parent=1 // pred_region
      %94 = dma.done [#allocation9], 128
    $region41: #{_actor_forward.1} parent=1 // pred_fallthru
      _
    %v95 = vld [vmem:[#allocation2] sm:$0xff]
    %v96 = vld [vmem:[#allocation5] sm:$0xff]
    %v97 = vld [vmem:[#allocation5 + $0x8] sm:$0xff]
    %v98 = vld [vmem:[#allocation5 + $0x10] sm:$0xff]
    %v99 = vld [vmem:[#allocation5 + $0x18] sm:$0xff]
    %v100 = vld [vmem:[#allocation5 + $0x20] sm:$0xff]
    %v101 = vld [vmem:[#allocation5 + $0x28] sm:$0xff]
    %v102 = vld [vmem:[#allocation5 + $0x30] sm:$0xff]
    %v103 = vld [vmem:[#allocation5 + $0x38] sm:$0xff]
    %v104 = vld [vmem:[#allocation10] ss:$4 sm:$0x3]
    %v106 = vperm.slane %v104, 0
    %v107 = vperm.slane %v104, 1
    %vm110 = vcmask 261120
    %v112 = vsel %vm110, %v95, 0
    %114 = vmatpush.msra.mxu0 0.0
    %115 = vmatpush.msra.mxu0 0.0
    %116 = vmatpush.msra.mxu0 0.0
    %117 = vmatpush.msra.mxu0 0.0
    %118 = vmatpush.msra.mxu0 0.0
    %119 = vmatpush.msra.mxu0 0.0
    %120 = vmatpush.msra.mxu0 0.0
    %121 = vmatpush.msra.mxu0 0.0
    %122 = vmatpush.msra.mxu0 0.0
    %123 = vmatpush.msra.mxu0 0.0
    %124 = vmatpush.msra.mxu0 0.0
    %125 = vmatpush.msra.mxu0 0.0
    %126 = vmatpush.msra.mxu0 %v102
    %127 = vmatpush.msra.mxu0 %v100
    %128 = vmatpush.msra.mxu0 %v98
    %129 = vmatpush.msra.mxu0 %v96
    %130 = vmatmul.f32.gmra.mxu0 %v112
    %v131 = vpop.f32.mrf.mxu0
    %v132 = vadd.f32 %v106, %v131
    %133 = vdwg.mxu0
    %134 = vmatpush.msra.mxu0 0.0
    %135 = vmatpush.msra.mxu0 0.0
    %136 = vmatpush.msra.mxu0 0.0
    %137 = vmatpush.msra.mxu0 0.0
    %138 = vmatpush.msra.mxu0 0.0
    %139 = vmatpush.msra.mxu0 0.0
    %140 = vmatpush.msra.mxu0 0.0
    %141 = vmatpush.msra.mxu0 0.0
    %142 = vmatpush.msra.mxu0 0.0
    %143 = vmatpush.msra.mxu0 0.0
    %144 = vmatpush.msra.mxu0 0.0
    %145 = vmatpush.msra.mxu0 0.0
    %146 = vmatpush.msra.mxu0 %v103
    %147 = vmatpush.msra.mxu0 %v101
    %148 = vmatpush.msra.mxu0 %v99
    %149 = vmatpush.msra.mxu0 %v97
    %150 = vmatmul.f32.gmra.mxu0 %v112
    %v151 = vpop.f32.mrf.mxu0
    %v152 = vadd.f32 %v107, %v151
    %153 = vdwg.mxu0
    %v154 = vmax.f32 %v132, 0.0
    %v155 = vmax.f32 %v152, 0.0
    %v156 = vld [vmem:[#allocation7] sm:$0xff]
    %v157 = vld [vmem:[#allocation7 + $0x8] sm:$0xff]
    %v158 = vld [vmem:[#allocation7 + $0x10] sm:$0xff]
    %v159 = vld [vmem:[#allocation7 + $0x18] sm:$0xff]
    %v160 = vld [vmem:[#allocation7 + $0x20] sm:$0xff]
    %v161 = vld [vmem:[#allocation7 + $0x28] sm:$0xff]
    %v162 = vld [vmem:[#allocation7 + $0x30] sm:$0xff]
    %v163 = vld [vmem:[#allocation7 + $0x38] sm:$0xff]
    %v164 = vld [vmem:[#allocation7 + $0x40] sm:$0xff]
    %v165 = vld [vmem:[#allocation7 + $0x48] sm:$0xff]
    %v166 = vld [vmem:[#allocation7 + $0x50] sm:$0xff]
    %v167 = vld [vmem:[#allocation7 + $0x58] sm:$0xff]
    %v168 = vld [vmem:[#allocation7 + $0x60] sm:$0xff]
    %v169 = vld [vmem:[#allocation7 + $0x68] sm:$0xff]
    %v170 = vld [vmem:[#allocation7 + $0x70] sm:$0xff]
    %v171 = vld [vmem:[#allocation7 + $0x78] sm:$0xff]
    %v172 = vld [vmem:[#allocation7 + $0x80] sm:$0xff]
    %v173 = vld [vmem:[#allocation7 + $0x88] sm:$0xff]
    %v174 = vld [vmem:[#allocation7 + $0x90] sm:$0xff]
    %v175 = vld [vmem:[#allocation7 + $0x98] sm:$0xff]
    %v176 = vld [vmem:[#allocation7 + $0xa0] sm:$0xff]
    %v177 = vld [vmem:[#allocation7 + $0xa8] sm:$0xff]
    %v178 = vld [vmem:[#allocation7 + $0xb0] sm:$0xff]
    %v179 = vld [vmem:[#allocation7 + $0xb8] sm:$0xff]
    %v180 = vld [vmem:[#allocation7 + $0xc0] sm:$0xff]
    %v181 = vld [vmem:[#allocation7 + $0xc8] sm:$0xff]
    %v182 = vld [vmem:[#allocation7 + $0xd0] sm:$0xff]
    %v183 = vld [vmem:[#allocation7 + $0xd8] sm:$0xff]
    %v184 = vld [vmem:[#allocation7 + $0xe0] sm:$0xff]
    %v185 = vld [vmem:[#allocation7 + $0xe8] sm:$0xff]
    %v186 = vld [vmem:[#allocation7 + $0xf0] sm:$0xff]
    %v187 = vld [vmem:[#allocation7 + $0xf8] sm:$0xff]
    %v188 = vld [vmem:[#allocation10 + $0x1] sm:$0x1]
    %v189 = vperm.slane %v188, 0
    %190 = vmatpush.msra.mxu0 %v171
    %191 = vmatpush.msra.mxu0 %v170
    %192 = vmatpush.msra.mxu0 %v169
    %193 = vmatpush.msra.mxu0 %v168
    %194 = vmatpush.msra.mxu0 %v167
    %195 = vmatpush.msra.mxu0 %v166
    %196 = vmatpush.msra.mxu0 %v165
    %197 = vmatpush.msra.mxu0 %v164
    %198 = vmatpush.msra.mxu0 %v163
    %199 = vmatpush.msra.mxu0 %v162
    %200 = vmatpush.msra.mxu0 %v161
    %201 = vmatpush.msra.mxu0 %v160
    %202 = vmatpush.msra.mxu0 %v159
    %203 = vmatpush.msra.mxu0 %v158
    %204 = vmatpush.msra.mxu0 %v157
    %205 = vmatpush.msra.mxu0 %v156
    %206 = vmatmul.f32.gmra.mxu0 %v154
    %v207 = vpop.f32.mrf.mxu0
    %v208 = vadd.f32 %v189, %v207
    %209 = vdwg.mxu0
    %210 = vmatpush.msra.mxu0 %v187
    %211 = vmatpush.msra.mxu0 %v186
    %212 = vmatpush.msra.mxu0 %v185
    %213 = vmatpush.msra.mxu0 %v184
    %214 = vmatpush.msra.mxu0 %v183
    %215 = vmatpush.msra.mxu0 %v182
    %216 = vmatpush.msra.mxu0 %v181
    %217 = vmatpush.msra.mxu0 %v180
    %218 = vmatpush.msra.mxu0 %v179
    %219 = vmatpush.msra.mxu0 %v178
    %220 = vmatpush.msra.mxu0 %v177
    %221 = vmatpush.msra.mxu0 %v176
    %222 = vmatpush.msra.mxu0 %v175
    %223 = vmatpush.msra.mxu0 %v174
    %224 = vmatpush.msra.mxu0 %v173
    %225 = vmatpush.msra.mxu0 %v172
    %226 = vmatmul.f32.gmra.mxu0 %v155
    %v227 = vpop.f32.mrf.mxu0
    %v228 = vadd.f32 %v208, %v227
    %229 = vdwg.mxu0
    %v230 = vmax.f32 %v228, 0.0
    %v231 = vld [vmem:[#allocation8] sm:$0xff]
    %v232 = vld [vmem:[#allocation8 + $0x8] sm:$0xff]
    %v233 = vld [vmem:[#allocation8 + $0x10] sm:$0xff]
    %v234 = vld [vmem:[#allocation8 + $0x18] sm:$0xff]
    %v235 = vld [vmem:[#allocation8 + $0x20] sm:$0xff]
    %v236 = vld [vmem:[#allocation8 + $0x28] sm:$0xff]
    %v237 = vld [vmem:[#allocation8 + $0x30] sm:$0xff]
    %v238 = vld [vmem:[#allocation8 + $0x38] sm:$0xff]
    %v239 = vld [vmem:[#allocation8 + $0x40] sm:$0xff]
    %v240 = vld [vmem:[#allocation8 + $0x48] sm:$0xff]
    %v241 = vld [vmem:[#allocation8 + $0x50] sm:$0xff]
    %v242 = vld [vmem:[#allocation8 + $0x58] sm:$0xff]
    %v243 = vld [vmem:[#allocation8 + $0x60] sm:$0xff]
    %v244 = vld [vmem:[#allocation8 + $0x68] sm:$0xff]
    %v245 = vld [vmem:[#allocation8 + $0x70] sm:$0xff]
    %v246 = vld [vmem:[#allocation8 + $0x78] sm:$0xff]
    %247 = vmatpush.msra.mxu0 %v246
    %248 = vmatpush.msra.mxu0 %v245
    %249 = vmatpush.msra.mxu0 %v244
    %250 = vmatpush.msra.mxu0 %v243
    %251 = vmatpush.msra.mxu0 %v242
    %252 = vmatpush.msra.mxu0 %v241
    %253 = vmatpush.msra.mxu0 %v240
    %254 = vmatpush.msra.mxu0 %v239
    %255 = vmatpush.msra.mxu0 %v238
    %256 = vmatpush.msra.mxu0 %v237
    %257 = vmatpush.msra.mxu0 %v236
    %258 = vmatpush.msra.mxu0 %v235
    %259 = vmatpush.msra.mxu0 %v234
    %260 = vmatpush.msra.mxu0 %v233
    %261 = vmatpush.msra.mxu0 %v232
    %262 = vmatpush.msra.mxu0 %v231
    %263 = vmatmul.f32.gmra.mxu0 %v230
    %v264 = vpop.f32.mrf.mxu0
    %v265 = vadd.f32 0.0, %v264
    %266 = vdwg.mxu0
    %v267 = vld [vmem:[#allocation10 + $0x2] sm:$0x1]
    %v268 = vperm.slane %v267, 0
    %v269 = vadd.f32 %v265, %v268
    %v270 = vtanh.pop %v269
    %vm271 = vcmask 64512
    %272 = vst.msk [vmem:[#allocation11] sm:$0xff] %vm271, %v270
    // Predicated region
    $region42: #{_actor_forward.1} parent=1 // pred_check
      _
    $region43: #{_actor_forward.1} parent=1 // pred_check_branch
      %274 = sbr.rel (0) target = $region45
    $region44: #{_actor_forward.1} parent=1 // pred_region
      %276 = vsyncadd [#allocation4], 0
      %s278 = sshll.u32 [#allocation11], 4
      %s279 = int_to_ptr.vmem [resolvable:$true] %s278
      %s280 = sshll.u32 %s5, 4
      %s281 = int_to_ptr.hbm [resolvable:$true] %s280
      %283 = dma.vmem_to_hbm [thread:$0]  %s279, 128, %s281, [#allocation4]
    $region45: #{_actor_forward.1} parent=1 // pred_fallthru
      _
    // Predicated region
    $region46: #{_actor_forward.1} parent=1 // pred_check
      _
    $region47: #{_actor_forward.1} parent=1 // pred_check_branch
      %285 = sbr.rel (0) target = $region49
    $region48: #{_actor_forward.1} parent=1 // pred_region
      %287 = dma.done [#allocation4], 128
    $region49: #{_actor_forward.1} parent=1 // pred_fallthru
      _
    %288 = vsyncpa [#allocation3], 1
    %289 = vsyncpa [#allocation6], 1
    %290 = vsyncpa [#allocation9], 1
    %291 = vsyncpa [#allocation4], 1

</llo_original>
